<compile_context>
chip_gen: v6e
topology: v6e:2x2x1
jax: 0.10.0
libtpu: 0.0.40
codegen_flags: <defaults>
</compile_context>

<pallas_src>
import jax
import jax.numpy as jnp
from jax.experimental import pallas as pl
from jax.experimental.pallas import tpu as pltpu


_LANE = 128
_TILE_TARGET_BYTES = 4 << 20   # ~4 MiB per-step x tile (roofline sweet spot)
_HW_TILE_MAX_BYTES = 4 << 20   # if one batch element exceeds this, tile HW


def _choose_tiles(B, C, HW, itemsize):
    """Pick (TB, THW): ~4 MiB x tiles, >=2 parallel batch blocks when B >= 2."""
    per_b = C * HW * itemsize
    if per_b > _HW_TILE_MAX_BYTES:
        # One batch element alone is big: tile the spatial axis.
        tb = 1
        # Floor: each contiguous per-channel row chunk >= ~1 KiB
        # (thw >= 512 for 2-byte dtypes, >= 256 for f32), multiple of 128.
        min_thw = max(_LANE, ((1024 // itemsize + _LANE - 1) // _LANE) * _LANE)
        thw = (_HW_TILE_MAX_BYTES // (C * itemsize)) // _LANE * _LANE
        thw = max(min_thw, thw)
        thw = min(thw, HW)
    else:
        # Small feature map: batch multiple elements per grid step.
        thw = HW
        tb = max(1, min(B, _TILE_TARGET_BYTES // max(per_b, 1)))
        if B >= 2:
            # Keep >= 2 blocks on the parallel axis so both v7x TCs run
            # (negligible extra per-step overhead on single-TC v5e/v6e).
            tb = min(tb, (B + 1) // 2)
    return tb, thw


def _make_single_pass_kernel(HW, tb):
    """nk == 1: whole spatial extent per step, no scratch / no pl.when."""
    inv_hw = 1.0 / float(HW)

    def kernel(x_ref, w1t_ref, w2t_ref, o_ref):
        x = x_ref[...]                                            # (tb, C, HW)
        # Sum accumulates in f32 (single cast per element); max stays in the
        # input dtype and is cast only on the tiny (tb, C) result.
        avg = jnp.sum(x.astype(jnp.float32), axis=-1) * inv_hw    # (tb, C)
        mxv = jnp.max(x, axis=-1).astype(jnp.float32)             # (tb, C)
        pooled = jnp.concatenate([avg, mxv], axis=0)              # (2*tb, C)
        h = jnp.maximum(
            jnp.dot(pooled, w1t_ref[...],
                    preferred_element_type=jnp.float32), 0.0)     # (2*tb, Cr)
        y = jnp.dot(h, w2t_ref[...],
                    preferred_element_type=jnp.float32)           # (2*tb, C)
        o_ref[...] = jax.nn.sigmoid(y[0:tb] + y[tb:])[:, None, :].astype(
            o_ref.dtype)

    return kernel


def _make_multi_pass_kernel(HW, thw, tb, C):
    """nk > 1: HW tiled; merged (2*tb, C) running sum/max scratch."""
    inv_hw = 1.0 / float(HW)
    has_partial = (HW % thw) != 0

    def _accum_unmasked(acc, x):
        acc[0:tb, :] = acc[0:tb, :] + jnp.sum(x.astype(jnp.float32), axis=-1)
        acc[tb:, :] = jnp.maximum(acc[tb:, :],
                                  jnp.max(x, axis=-1).astype(jnp.float32))

    def _accum_masked(acc, x, k):
        # Only the last k step (partial tile) pays for the selects.
        lane = jax.lax.broadcasted_iota(jnp.int32, (1, 1, thw), 2) + k * thw
        valid = lane < HW
        xs = jnp.where(valid, x, 0.0).astype(jnp.float32)
        xm = jnp.where(valid, x, -jnp.inf)
        acc[0:tb, :] = acc[0:tb, :] + jnp.sum(xs, axis=-1)
        acc[tb:, :] = jnp.maximum(acc[tb:, :],
                                  jnp.max(xm, axis=-1).astype(jnp.float32))

    def kernel(x_ref, w1t_ref, w2t_ref, o_ref, acc):
        # x_ref  : (tb, C, thw) tile of x
        # acc    : (2*tb, C) f32 scratch; rows [0:tb]=running sum, [tb:]=max
        k = pl.program_id(1)
        nk = pl.num_programs(1)

        @pl.when(k == 0)
        def _init():
            acc[0:tb, :] = jnp.zeros((tb, C), jnp.float32)
            acc[tb:, :] = jnp.full((tb, C), -jnp.inf, jnp.float32)

        x = x_ref[...]

        if not has_partial:
            # HW % thw == 0: no masking anywhere (steady-state is select-free).
            _accum_unmasked(acc, x)
        else:
            @pl.when(k < nk - 1)
            def _steady():
                _accum_unmasked(acc, x)

            @pl.when(k == nk - 1)
            def _tail():
                _accum_masked(acc, x, k)

        @pl.when(k == nk - 1)
        def _finalize():
            acc[0:tb, :] = acc[0:tb, :] * inv_hw        # sum -> mean in place
            pooled = acc[...]                           # (2*tb, C), no concat
            h = jnp.maximum(
                jnp.dot(pooled, w1t_ref[...],
                        preferred_element_type=jnp.float32), 0.0)
            y = jnp.dot(h, w2t_ref[...], preferred_element_type=jnp.float32)
            o_ref[...] = jax.nn.sigmoid(y[0:tb] + y[tb:])[:, None, :].astype(
                o_ref.dtype)

    return kernel


def channel_attention(x, w1, w2, *, tb=None, thw=None):
    """x: (B, C, H, W). w1: (Cr, C). w2: (C, Cr). Returns (B, C, 1, 1) in x.dtype."""
    B, C, H, W = x.shape
    Cr = w1.shape[0]
    HW = H * W

    x_flat = x.reshape(B, C, HW)
    w1t = jnp.asarray(w1, jnp.float32).T            # (C, Cr)
    w2t = jnp.asarray(w2, jnp.float32).T            # (Cr, C)

    auto_tb, auto_thw = _choose_tiles(B, C, HW, x.dtype.itemsize)
    tb = min(B, auto_tb if tb is None else tb)
    thw = min(HW, auto_thw if thw is None else thw)

    nb = pl.cdiv(B, tb)
    nk = pl.cdiv(HW, thw)

    cost = pl.CostEstimate(
        flops=2 * B * C * HW + 8 * B * C * Cr,
        transcendentals=B * C,
        bytes_accessed=x_flat.size * x_flat.dtype.itemsize
        + (w1t.size + w2t.size) * 4 + B * C * x.dtype.itemsize,
    )

    if nk == 1:
        kernel = _make_single_pass_kernel(HW=HW, tb=tb)
        grid_spec = pltpu.PrefetchScalarGridSpec(
            num_scalar_prefetch=0,
            grid=(nb,),
            in_specs=[
                pl.BlockSpec((tb, C, HW), lambda b: (b, 0, 0)),
                pl.BlockSpec((C, Cr), lambda b: (0, 0)),
                pl.BlockSpec((Cr, C), lambda b: (0, 0)),
            ],
            out_specs=pl.BlockSpec((tb, 1, C), lambda b: (b, 0, 0)),
        )
        dims = ("parallel",)
    else:
        kernel = _make_multi_pass_kernel(HW=HW, thw=thw, tb=tb, C=C)
        grid_spec = pltpu.PrefetchScalarGridSpec(
            num_scalar_prefetch=0,
            grid=(nb, nk),                          # reduction (HW) axis last
            in_specs=[
                pl.BlockSpec((tb, C, thw), lambda b, k: (b, 0, k)),
                pl.BlockSpec((C, Cr), lambda b, k: (0, 0)),
                pl.BlockSpec((Cr, C), lambda b, k: (0, 0)),
            ],
            out_specs=pl.BlockSpec((tb, 1, C), lambda b, k: (b, 0, 0)),
            scratch_shapes=[
                pltpu.VMEM((2 * tb, C), jnp.float32),   # merged sum/max acc
            ],
        )
        dims = ("parallel", "arbitrary")

    out = pl.pallas_call(
        kernel,
        out_shape=jax.ShapeDtypeStruct((B, 1, C), x.dtype),
        grid_spec=grid_spec,
        compiler_params=pltpu.CompilerParams(
            dimension_semantics=dims,
            # Explicit limit: needed on v5e (16 MiB default scoped VMEM) with
            # ~4 MiB double-buffered tiles; safe on v6e/v7x.
            vmem_limit_bytes=32 * 1024 * 1024,
        ),
        cost_estimate=cost,
    )(x_flat, w1t, w2t)

    return out.reshape(B, C, 1, 1)


def channel_attention_ref(x, w1, w2):
    """Pure-JAX reference (mirrors the PyTorch forward)."""
    avg = jnp.mean(x, axis=(2, 3))                 # (B, C)
    mx = jnp.max(x, axis=(2, 3))                   # (B, C)

    def mlp(v):
        h = jnp.maximum(v @ w1.T, 0.0)             # (B, Cr)
        return h @ w2.T                            # (B, C)

    out = jax.nn.sigmoid(mlp(avg) + mlp(mx))
    return out.reshape(*out.shape, 1, 1)


if __name__ == "__main__":
    def run_case(B, C, H, W, ratio, tb=None, thw=None):
        Cr = max(1, C // ratio)
        key = jax.random.PRNGKey(0)
        kx, k1, k2 = jax.random.split(key, 3)
        x = jax.random.normal(kx, (B, C, H, W), dtype=jnp.float32)
        # 1x1 convs with no bias == dense layers over channels.
        w1 = jax.random.normal(k1, (Cr, C), dtype=jnp.float32) * 0.1
        w2 = jax.random.normal(k2, (C, Cr), dtype=jnp.float32) * 0.1

        out = jax.block_until_ready(channel_attention(x, w1, w2, tb=tb, thw=thw))
        ref = channel_attention_ref(x, w1, w2)
        assert out.shape == (B, C, 1, 1)
        assert jnp.allclose(out, ref, atol=1e-5, rtol=1e-5), \
            f"mismatch vs reference for shape {(B, C, H, W)} tb={tb} thw={thw}"

    # Main case: in_planes=32, ratio=8 -> hidden=4 (single-pass, nb=2).
    run_case(2, 32, 16, 16, 8)
    # Non-128-multiple spatial extent, partial batch block (single-pass).
    run_case(3, 32, 15, 15, 8)
    # Forced HW tiling, HW % thw == 0 (multi-pass, unmasked steady state).
    run_case(2, 32, 16, 16, 8, tb=1, thw=128)
    # Forced HW tiling with a partial last HW tile (multi-pass, masked tail).
    run_case(2, 32, 15, 15, 8, tb=1, thw=128)

    print("KERNEL_OK")
</pallas_src>

<mosaic_0001>
module attributes {stable_mosaic.version = 11 : i64} {
  func.func @kernel(%arg0: i32, %arg1: memref<1x32x256xf32, #tpu.memory_space<vmem>>, %arg2: memref<32x4xf32, #tpu.memory_space<vmem>>, %arg3: memref<4x32xf32, #tpu.memory_space<vmem>>, %arg4: memref<1x1x32xf32, #tpu.memory_space<vmem>>) attributes {dimension_semantics = [#tpu.dimension_semantics<parallel>], iteration_bounds = array<i64: 2>, scalar_prefetch = 0 : i64, scratch_operands = 0 : i64, tpu.core_type = #tpu.core_type<tc>, window_params = [{transform_indices = @transform_0, window_bounds = array<i64: 1, 32, 256>}, {pipeline_mode = #tpu.pipeline_mode<synchronous>, transform_indices = @transform_1, window_bounds = array<i64: 32, 4>}, {pipeline_mode = #tpu.pipeline_mode<synchronous>, transform_indices = @transform_2, window_bounds = array<i64: 4, 32>}, {transform_indices = @transform_3, window_bounds = array<i64: 1, 1, 32>}]} {
    %c0 = arith.constant 0 : index
    %c0_0 = arith.constant 0 : index
    %c0_1 = arith.constant 0 : index
    %0 = vector.load %arg1[%c0, %c0_0, %c0_1] : memref<1x32x256xf32, #tpu.memory_space<vmem>>, vector<1x32x256xf32>
    %cst = arith.constant dense<0.000000e+00> : vector<1x32xf32>
    %1 = vector.multi_reduction <add>, %0, %cst [2] : vector<1x32x256xf32> to vector<1x32xf32>
    %cst_2 = arith.constant 3.906250e-03 : f32
    %2 = vector.broadcast %cst_2 : f32 to vector<1x32xf32>
    %3 = arith.mulf %1, %2 : vector<1x32xf32>
    %cst_3 = arith.constant dense<0xFF800000> : vector<1x32xf32>
    %4 = vector.multi_reduction <maximumf>, %0, %cst_3 [2] : vector<1x32x256xf32> to vector<1x32xf32>
    %5 = tpu.concatenate %3, %4 in 0 : vector<1x32xf32>, vector<1x32xf32> -> vector<2x32xf32>
    %c0_4 = arith.constant 0 : index
    %c0_5 = arith.constant 0 : index
    %6 = vector.load %arg2[%c0_4, %c0_5] : memref<32x4xf32, #tpu.memory_space<vmem>>, vector<32x4xf32>
    %cst_6 = arith.constant dense<0.000000e+00> : vector<2x4xf32>
    %7 = tpu.matmul %5, %6, %cst_6 {dimension_numbers = #tpu.dot_dimension_numbers<[1], [0], [0], [1], [0, 0, 1, 1], [], []>} : vector<2x32xf32>, vector<32x4xf32>, vector<2x4xf32> -> vector<2x4xf32>
    %cst_7 = arith.constant 0.000000e+00 : f32
    %8 = vector.broadcast %cst_7 : f32 to vector<2x4xf32>
    %9 = arith.maximumf %7, %8 : vector<2x4xf32>
    %c0_8 = arith.constant 0 : index
    %c0_9 = arith.constant 0 : index
    %10 = vector.load %arg3[%c0_8, %c0_9] : memref<4x32xf32, #tpu.memory_space<vmem>>, vector<4x32xf32>
    %cst_10 = arith.constant dense<0.000000e+00> : vector<2x32xf32>
    %11 = tpu.matmul %9, %10, %cst_10 {dimension_numbers = #tpu.dot_dimension_numbers<[1], [0], [0], [1], [0, 0, 1, 1], [], []>} : vector<2x4xf32>, vector<4x32xf32>, vector<2x32xf32> -> vector<2x32xf32>
    %12 = vector.extract_strided_slice %11 {offsets = [0, 0], sizes = [1, 32], strides = [1, 1]} : vector<2x32xf32> to vector<1x32xf32>
    %13 = vector.extract_strided_slice %11 {offsets = [1, 0], sizes = [1, 32], strides = [1, 1]} : vector<2x32xf32> to vector<1x32xf32>
    %14 = arith.addf %12, %13 : vector<1x32xf32>
    %15 = arith.negf %14 : vector<1x32xf32>
    %16 = math.exp %15 : vector<1x32xf32>
    %cst_11 = arith.constant 1.000000e+00 : f32
    %17 = vector.broadcast %cst_11 : f32 to vector<1x32xf32>
    %18 = arith.addf %17, %16 : vector<1x32xf32>
    %19 = arith.divf %17, %18 : vector<1x32xf32>
    %20 = vector.shape_cast %19 : vector<1x32xf32> to vector<1x1x32xf32>
    %c0_12 = arith.constant 0 : index
    %c0_13 = arith.constant 0 : index
    %c0_14 = arith.constant 0 : index
    %21 = vector.load %arg4[%c0_12, %c0_13, %c0_14] : memref<1x1x32xf32, #tpu.memory_space<vmem>>, vector<1x1x32xf32>
    tpu.vector_store %arg4[%c0_12, %c0_13, %c0_14], %20 {strides = array<i32>} : memref<1x1x32xf32, #tpu.memory_space<vmem>>, vector<1x1x32xf32>,
    return
  }
  func.func @transform_0(%arg0: i32) -> (i32, i32, i32) {
    %c0_i32 = arith.constant 0 : i32
    %c0_i32_0 = arith.constant 0 : i32
    %c0_i32_1 = arith.constant 0 : i32
    return %arg0, %c0_i32, %c0_i32_0 : i32, i32, i32
  }
  func.func @transform_1(%arg0: i32) -> (i32, i32) {
    %c0_i32 = arith.constant 0 : i32
    %c0_i32_0 = arith.constant 0 : i32
    %c0_i32_1 = arith.constant 0 : i32
    return %c0_i32, %c0_i32_0 : i32, i32
  }
  func.func @transform_2(%arg0: i32) -> (i32, i32) {
    %c0_i32 = arith.constant 0 : i32
    %c0_i32_0 = arith.constant 0 : i32
    %c0_i32_1 = arith.constant 0 : i32
    return %c0_i32, %c0_i32_0 : i32, i32
  }
  func.func @transform_3(%arg0: i32) -> (i32, i32, i32) {
    %c0_i32 = arith.constant 0 : i32
    %c0_i32_0 = arith.constant 0 : i32
    %c0_i32_1 = arith.constant 0 : i32
    return %arg0, %c0_i32, %c0_i32_0 : i32, i32, i32
  }
}

</mosaic_0001>

<llo_original>
// kernel: tpu_custom_call.1
$region0: #{tpu_custom_call.1}
  #allocation0 [shape = 'u32[]', space=smem, size = 0x4, offset = 0x4, fixed_abs, tag = 'smem constant byte address 0x4 - core index']
  #allocation1 [shape = 'u32[144,128]{1,0:T(1,128)}', space=vmem, size = 0x12000, scoped, tag = 'internal scratch']
  %s0 = inlined_call_operand.hbm [shape: f32[2,32,256], index: 0, kind: input, shape index: {}]
  %s1 = inlined_call_operand.vmem [shape: f32[32,4], index: 1, kind: input, shape index: {}]
  %s2 = inlined_call_operand.vmem [shape: f32[4,32], index: 2, kind: input, shape index: {}]
  %s3 = inlined_call_operand.hbm [shape: f32[2,1,32], index: 3, kind: output, shape index: {}]
  %s4 = sld [smem:[#allocation0]]
  $region49: #{tpu_custom_call.1} parent=0
    _
  %s6 = ssub.s32 1, %s4
  %s7 = scalar_select 0, %s6, %s4
  $region1: #{tpu_custom_call.1} parent=0
    #allocation2 [shape = 'u8[65536]{0}', space=vmem, size = 0x10000, scoped, tag = 'input window, operand 0']
    #allocation3 [shape = 's32[2]{0}', space=sflag, size = 0x8, scoped, tag = 'scoped memory for tpu_custom_call.1']
    #allocation4 [shape = 's32[2]{0}', space=sflag, size = 0x8, scoped, tag = 'scoped memory for tpu_custom_call.1']
    #allocation5 [shape = 'u8[1024]{0}', space=vmem, size = 0x400, scoped, tag = 'output window, operand 0']
    %8 = vsyncpa [#allocation3], 0
    %s9 = scalar_lea.sflag [#allocation3], 1
    %10 = vsyncpa %s9, 0
    %11 = vsyncpa [#allocation4], 0
    %s12 = scalar_lea.sflag [#allocation4], 1
    %13 = vsyncpa %s12, 0
    loop: start=0, step=1, limit=4
    $region2: #{tpu_custom_call.1} parent=1 // loop_pre_header
      _
    $region3: #{tpu_custom_call.1} parent=1 // loop_header
      %s15 = sphi 0, %s19
      %p16 = scmp.ge.s32.totalorder %s15, 4
      %s25 = sphi 0, %s27
      %s28 = sphi 0, %s25
      %s29 = sphi 0, %s28
      %s45 = sphi 0, %s29
      %s49 = sphi 0, %s49
      %s51 = sphi 0, %s49
      %s52 = sphi 0, %s51
      %s66 = sphi 0, %s52
      %s70 = sphi 0, %s70
      %s72 = sphi 0, %s70
      %s73 = sphi 0, %s72
      %s87 = sphi 0, %s73
      %s93 = sphi 0, %s95
      %s96 = sphi 0, %s93
      %s97 = sphi 0, %s96
      %s113 = sphi 0, %s97
    $region4: #{tpu_custom_call.1} parent=1 // loop_header_branch
      %18 = sbr.rel (%p16) target = $region8
    $region5: #{tpu_custom_call.1} parent=1 // loop_body
      %s20 = ssub.s32 %s15, 1
      %s21 = ssub.s32 %s15, 2
      %s22 = sadd.s32 %s15, 1
      %s23 = ssub.s32 %s15, %s22
      %p24 = scmp.eq.s32.totalorder %s23, 0
      %s26 = sadd.s32 %s25, 1
      %s27 = scalar_select %p24, %s25, %s26
      %p30 = pneg %p24
      %p31 = scmp.eq.s32.totalorder %s15, 1
      %p32 = por %p30, %p31
      %p33 = scmp.ne.s32.totalorder %s25, %s28
      %p34 = scmp.eq.s32.totalorder %s15, 0
      %p35 = por %p33, %p34
      %p36 = scmp.ne.s32.totalorder %s25, %s28
      %p37 = scmp.eq.s32.totalorder %s20, 1
      %p38 = por %p36, %p37
      %p39 = scmp.ne.s32.totalorder %s28, %s29
      %p40 = scmp.eq.s32.totalorder %s20, 0
      %p41 = por %p39, %p40
      %p42 = scmp.ne.s32.totalorder %s28, %s29
      %p43 = scmp.eq.s32.totalorder %s21, 1
      %p44 = por %p42, %p43
      %p46 = scmp.ne.s32.totalorder %s29, %s45
      %p47 = scmp.eq.s32.totalorder %s21, 0
      %p48 = por %p46, %p47
      %s50 = sadd.s32 %s49, 1
      %p53 = scmp.eq.s32.totalorder %s15, 1
      %p54 = scmp.ne.s32.totalorder %s49, %s51
      %p55 = scmp.eq.s32.totalorder %s15, 0
      %p56 = por %p54, %p55
      %p57 = scmp.ne.s32.totalorder %s49, %s51
      %p58 = scmp.eq.s32.totalorder %s20, 1
      %p59 = por %p57, %p58
      %p60 = scmp.ne.s32.totalorder %s51, %s52
      %p61 = scmp.eq.s32.totalorder %s20, 0
      %p62 = por %p60, %p61
      %p63 = scmp.ne.s32.totalorder %s51, %s52
      %p64 = scmp.eq.s32.totalorder %s21, 1
      %p65 = por %p63, %p64
      %p67 = scmp.ne.s32.totalorder %s52, %s66
      %p68 = scmp.eq.s32.totalorder %s21, 0
      %p69 = por %p67, %p68
      %s71 = sadd.s32 %s70, 1
      %p74 = scmp.eq.s32.totalorder %s15, 1
      %p75 = scmp.ne.s32.totalorder %s70, %s72
      %p76 = scmp.eq.s32.totalorder %s15, 0
      %p77 = por %p75, %p76
      %p78 = scmp.ne.s32.totalorder %s70, %s72
      %p79 = scmp.eq.s32.totalorder %s20, 1
      %p80 = por %p78, %p79
      %p81 = scmp.ne.s32.totalorder %s72, %s73
      %p82 = scmp.eq.s32.totalorder %s20, 0
      %p83 = por %p81, %p82
      %p84 = scmp.ne.s32.totalorder %s72, %s73
      %p85 = scmp.eq.s32.totalorder %s21, 1
      %p86 = por %p84, %p85
      %p88 = scmp.ne.s32.totalorder %s73, %s87
      %p89 = scmp.eq.s32.totalorder %s21, 0
      %p90 = por %p88, %p89
      %s91 = ssub.s32 %s15, %s22
      %p92 = scmp.eq.s32.totalorder %s91, 0
      %s94 = sadd.s32 %s93, 1
      %s95 = scalar_select %p92, %s93, %s94
      %p98 = pneg %p92
      %p99 = scmp.eq.s32.totalorder %s15, 1
      %p100 = por %p98, %p99
      %p101 = scmp.ne.s32.totalorder %s93, %s96
      %p102 = scmp.eq.s32.totalorder %s15, 0
      %p103 = por %p101, %p102
      %p104 = scmp.ne.s32.totalorder %s93, %s96
      %p105 = scmp.eq.s32.totalorder %s20, 1
      %p106 = por %p104, %p105
      %p107 = scmp.ne.s32.totalorder %s96, %s97
      %p108 = scmp.eq.s32.totalorder %s20, 0
      %p109 = por %p107, %p108
      %p110 = scmp.ne.s32.totalorder %s96, %s97
      %p111 = scmp.eq.s32.totalorder %s21, 1
      %p112 = por %p110, %p111
      %p114 = scmp.ne.s32.totalorder %s97, %s113
      %p115 = scmp.eq.s32.totalorder %s21, 0
      %p116 = por %p114, %p115
      %p117 = scmp.le.s32.totalorder 1, %s15
      %p118 = scmp.lt.s32.totalorder %s15, 3
      %p119 = pnand %p117, %p118
      %p120 = pneg %p119
      // Predicated region
      $region9: #{tpu_custom_call.1} parent=5 // pred_check
        _
      $region10: #{tpu_custom_call.1} parent=5 // pred_check_branch
        %122 = sbr.rel (%p119) target = $region12
      $region11: #{tpu_custom_call.1} parent=5 // pred_region
        %s123 = ssub.s32 %s15, 1
        // Predicated region
        $region13: #{tpu_custom_call.1} parent=11 // pred_check
          %p124 = pneg %p62
        $region14: #{tpu_custom_call.1} parent=11 // pred_check_branch
          %126 = sbr.rel (%p124) target = $region16
        $region15: #{tpu_custom_call.1} parent=11 // pred_region
          _
        $region16: #{tpu_custom_call.1} parent=11 // pred_fallthru
          _
        // Predicated region
        $region17: #{tpu_custom_call.1} parent=11 // pred_check
          %p127 = pneg %p83
        $region18: #{tpu_custom_call.1} parent=11 // pred_check_branch
          %129 = sbr.rel (%p127) target = $region20
        $region19: #{tpu_custom_call.1} parent=11 // pred_region
          _
        $region20: #{tpu_custom_call.1} parent=11 // pred_fallthru
          _
      $region12: #{tpu_custom_call.1} parent=5 // pred_fallthru
        _
      %p130 = scmp.lt.s32.totalorder %s15, 2
      // Predicated region
      $region21: #{tpu_custom_call.1} parent=5 // pred_check
        %p131 = pneg %p130
      $region22: #{tpu_custom_call.1} parent=5 // pred_check_branch
        %133 = sbr.rel (%p131) target = $region24
      $region23: #{tpu_custom_call.1} parent=5 // pred_region
        // Predicated region
        $region25: #{tpu_custom_call.1} parent=23 // pred_check
          %p134 = pneg %p35
        $region26: #{tpu_custom_call.1} parent=23 // pred_check_branch
          %136 = sbr.rel (%p134) target = $region28
        $region27: #{tpu_custom_call.1} parent=23 // pred_region
          %s137 = sand.u32 %s25, 1
          %s138 = scalar_lea.sflag [#allocation3], %s137
          %s139 = sand.u32 %s25, 1
          %s140 = smul.addr %s139, 64
          %s141 = scalar_lea.vmem [#allocation2], %s140
          %s143 = ssub.s32 1024, 1024
          %144 = vsyncadd %s138, %s143
          %s145 = smul.addr %s15, 8
          %s146 = smul.addr %s145, 128
          %s147 = scalar_lea.hbm %s0, %s146
          %s148 = sshll.u32 %s141, 4
          %s149 = int_to_ptr.vmem [resolvable:$true] %s148
          %154 = dma.hbm_to_vmem [thread:$0]  %s147, 1024, %s149, %s138, 256, 256, 16
        $region28: #{tpu_custom_call.1} parent=23 // pred_fallthru
          _
      $region24: #{tpu_custom_call.1} parent=5 // pred_fallthru
        _
      %p155 = scmp.le.s32.totalorder 1, %s15
      %p156 = scmp.lt.s32.totalorder %s15, 3
      %p157 = pnand %p155, %p156
      %p158 = pneg %p157
      // Predicated region
      $region29: #{tpu_custom_call.1} parent=5 // pred_check
        _
      $region30: #{tpu_custom_call.1} parent=5 // pred_check_branch
        %160 = sbr.rel (%p157) target = $region32
      $region31: #{tpu_custom_call.1} parent=5 // pred_region
        %s161 = ssub.s32 %s15, 1
        %s162 = sand.u32 %s28, 1
        %s163 = scalar_lea.sflag [#allocation3], %s162
        %s164 = sand.u32 %s28, 1
        %s165 = smul.addr %s164, 64
        %s166 = scalar_lea.vmem [#allocation2], %s165
        // Predicated region
        $region33: #{tpu_custom_call.1} parent=31 // pred_check
          %p167 = pneg %p41
        $region34: #{tpu_custom_call.1} parent=31 // pred_check_branch
          %169 = sbr.rel (%p167) target = $region36
        $region35: #{tpu_custom_call.1} parent=31 // pred_region
          %170 = dma.done %s163, 1024
        $region36: #{tpu_custom_call.1} parent=31 // pred_fallthru
          _
        %s171 = sand.u32 %s28, 1
        %s172 = scalar_lea.sflag [#allocation3], %s171
        %s173 = sand.u32 %s28, 1
        %s174 = smul.addr %s173, 64
        %s175 = scalar_lea.vmem [#allocation2], %s174
        %p176 = pneg %p41
        %p177 = pneg %p38
        %p178 = pneg %p62
        %p179 = pneg %p59
        %p180 = pneg %p83
        %p181 = pneg %p80
        %p182 = pneg %p109
        %p183 = pneg %p106
        %s184 = sand.u32 %s96, 1
        %s185 = scalar_lea.sflag [#allocation4], %s184
        %s186 = sand.u32 %s96, 1
        %s187 = scalar_lea.vmem [#allocation5], %s186
        %v188 = vld [vmem:[%s166] sm:$0xff]
        %v189 = vld [vmem:[%s166 + $0x8] sm:$0xff]
        %v190 = vld [vmem:[%s166 + $0x10] sm:$0xff]
        %v191 = vld [vmem:[%s166 + $0x18] sm:$0xff]
        %v192 = vld [vmem:[%s166 + $0x20] sm:$0xff]
        %v193 = vld [vmem:[%s166 + $0x28] sm:$0xff]
        %v194 = vld [vmem:[%s166 + $0x30] sm:$0xff]
        %v195 = vld [vmem:[%s166 + $0x38] sm:$0xff]
        %v196 = vadd.f32 %v188, %v189
        %197 = vadd.xlane.f32.xlu0 %v196
        %v198 = vpop.xlane.xlu0 %197
        %v199 = vadd.f32 %v190, %v191
        %200 = vadd.xlane.f32.xlu0 %v199
        %v201 = vpop.xlane.xlu0 %200
        %v202 = vadd.f32 %v192, %v193
        %203 = vadd.xlane.f32.xlu0 %v202
        %v204 = vpop.xlane.xlu0 %203
        %v205 = vadd.f32 %v194, %v195
        %206 = vadd.xlane.f32.xlu0 %v205
        %v207 = vpop.xlane.xlu0 %206
        %v208 = vmul.f32 %v198, 0.00390625
        %v209 = vmul.f32 %v201, 0.00390625
        %v210 = vmul.f32 %v204, 0.00390625
        %v211 = vmul.f32 %v207, 0.00390625
        %v212 = vmax.f32 %v188, %v189
        %213 = vmax.xlane.f32.xlu0 %v212
        %v214 = vpop.xlane.xlu0 %213
        %v215 = vmax.f32 %v190, %v191
        %216 = vmax.xlane.f32.xlu0 %v215
        %v217 = vpop.xlane.xlu0 %216
        %v218 = vmax.f32 %v192, %v193
        %219 = vmax.xlane.f32.xlu0 %v218
        %v220 = vpop.xlane.xlu0 %219
        %v221 = vmax.f32 %v194, %v195
        %222 = vmax.xlane.f32.xlu0 %v221
        %v223 = vpop.xlane.xlu0 %222
        %v228 = vlaneseq
        %v229 = vand.u32 %v228, 127
        %v230 = vlaneseq
        %v231 = vshrl.u32 %v230, 7
        %v232 = vsub.s32 %v229, %v231
        %v233 = vrot.slane %v208, %v232
        %v234 = vadd.s32 %v229, 4294967288
        %v235 = vlaneseq
        %v236 = vshrl.u32 %v235, 7
        %v237 = vsub.s32 %v234, %v236
        %v238 = vrot.slane %v209, %v237
        %vm239 = vcmask 130112
        %v240 = vsel %vm239, %v238, %v233
        %v241 = vadd.s32 %v229, 4294967280
        %v242 = vlaneseq
        %v243 = vshrl.u32 %v242, 7
        %v244 = vsub.s32 %v241, %v243
        %v245 = vrot.slane %v210, %v244
        %vm246 = vcmask 195712
        %v247 = vsel %vm246, %v245, %v240
        %v248 = vadd.s32 %v229, 4294967272
        %v249 = vlaneseq
        %v250 = vshrl.u32 %v249, 7
        %v251 = vsub.s32 %v248, %v250
        %v252 = vrot.slane %v211, %v251
        %vm253 = vcmask 261312
        %v254 = vsel %vm253, %v252, %v247
        %v260 = vlaneseq
        %v261 = vshrl.u32 %v260, 7
        %v262 = vsub.s32 %v229, %v261
        %v263 = vrot.slane %v214, %v262
        %v264 = vlaneseq
        %v265 = vshrl.u32 %v264, 7
        %v266 = vsub.s32 %v234, %v265
        %v267 = vrot.slane %v217, %v266
        %v268 = vsel %vm239, %v267, %v263
        %v269 = vlaneseq
        %v270 = vshrl.u32 %v269, 7
        %v271 = vsub.s32 %v241, %v270
        %v272 = vrot.slane %v220, %v271
        %v273 = vsel %vm246, %v272, %v268
        %v274 = vlaneseq
        %v275 = vshrl.u32 %v274, 7
        %v276 = vsub.s32 %v248, %v275
        %v277 = vrot.slane %v223, %v276
        %v278 = vsel %vm253, %v277, %v273
        %vm280 = vcmask 1040384
        %v281 = vsel %vm280, %v254, %v278
        %v282 = vld [vmem:[%s1] sm:$0xff]
        %v283 = vld [vmem:[%s1 + $0x8] sm:$0xff]
        %v284 = vld [vmem:[%s1 + $0x10] sm:$0xff]
        %v285 = vld [vmem:[%s1 + $0x18] sm:$0xff]
        %vm286 = vcmask 261120
        %v288 = vsel %vm286, %v281, 0
        %290 = vmatprep.subr.mxu0 0.0
        %291 = vmatpush1.msra.mxu0 0.0
        %292 = vmatprep.subr.mxu0 0.0
        %293 = vmatpush1.msra.mxu0 0.0
        %294 = vmatprep.subr.mxu0 0.0
        %295 = vmatpush1.msra.mxu0 0.0
        %296 = vmatprep.subr.mxu0 0.0
        %297 = vmatpush1.msra.mxu0 0.0
        %298 = vmatprep.subr.mxu0 0.0
        %299 = vmatpush1.msra.mxu0 0.0
        %300 = vmatprep.subr.mxu0 0.0
        %301 = vmatpush1.msra.mxu0 0.0
        %302 = vmatprep.subr.mxu0 0.0
        %303 = vmatpush1.msra.mxu0 0.0
        %304 = vmatprep.subr.mxu0 0.0
        %305 = vmatpush1.msra.mxu0 0.0
        %306 = vmatprep.subr.mxu0 0.0
        %307 = vmatpush1.msra.mxu0 0.0
        %308 = vmatprep.subr.mxu0 0.0
        %309 = vmatpush1.msra.mxu0 0.0
        %310 = vmatprep.subr.mxu0 0.0
        %311 = vmatpush1.msra.mxu0 0.0
        %312 = vmatprep.subr.mxu0 0.0
        %313 = vmatpush1.msra.mxu0 0.0
        %314 = vmatprep.subr.mxu0 0.0
        %315 = vmatpush1.msra.mxu0 %v285
        %316 = vmatprep.subr.mxu0 0.0
        %317 = vmatpush1.msra.mxu0 %v284
        %318 = vmatprep.subr.mxu0 0.0
        %319 = vmatpush1.msra.mxu0 %v283
        %320 = vmatprep.subr.mxu0 0.0
        %321 = vmatpush1.msra.mxu0 %v282
        %322 = vmatprep.subr.mxu0 0.0
        %323 = vmatpush2.msra.mxu0 0.0
        %324 = vmatprep.subr.mxu0 0.0
        %325 = vmatpush2.msra.mxu0 0.0
        %326 = vmatprep.subr.mxu0 0.0
        %327 = vmatpush2.msra.mxu0 0.0
        %328 = vmatprep.subr.mxu0 0.0
        %329 = vmatpush2.msra.mxu0 0.0
        %330 = vmatprep.subr.mxu0 0.0
        %331 = vmatpush2.msra.mxu0 0.0
        %332 = vmatprep.subr.mxu0 0.0
        %333 = vmatpush2.msra.mxu0 0.0
        %334 = vmatprep.subr.mxu0 0.0
        %335 = vmatpush2.msra.mxu0 0.0
        %336 = vmatprep.subr.mxu0 0.0
        %337 = vmatpush2.msra.mxu0 0.0
        %338 = vmatprep.subr.mxu0 0.0
        %339 = vmatpush2.msra.mxu0 0.0
        %340 = vmatprep.subr.mxu0 0.0
        %341 = vmatpush2.msra.mxu0 0.0
        %342 = vmatprep.subr.mxu0 0.0
        %343 = vmatpush2.msra.mxu0 0.0
        %344 = vmatprep.subr.mxu0 0.0
        %345 = vmatpush2.msra.mxu0 0.0
        %346 = vmatprep.subr.mxu0 0.0
        %347 = vmatpush2.msra.mxu0 0.0
        %348 = vmatprep.subr.mxu0 0.0
        %349 = vmatpush2.msra.mxu0 0.0
        %350 = vmatprep.subr.mxu0 0.0
        %351 = vmatpush2.msra.mxu0 0.0
        %352 = vmatprep.subr.mxu0 0.0
        %353 = vmatpush2.msra.mxu0 0.0
        %354 = vmatprep.mubr.f32.mxu0 0.0
        %355 = vmatmul.mubr.f32.gmra.mxu0 %v288
        %v356 = vpop.f32.mrf.mxu0
        %v357 = vadd.f32 0.0, %v356
        %v358 = vpop.f32.mrf.mxu0
        %359 = vdwg.mxu0
        %v360 = vmax.f32 %v357, 0.0
        %v361 = vld [vmem:[%s2] sm:$0xf]
        %vm362 = vcmask 31744
        %v364 = vsel %vm362, %v360, 0
        %vm366 = vcmask 1043456
        %v368 = vsel %vm366, %v361, 0
        %370 = vmatprep.subr.mxu0 0.0
        %371 = vmatpush1.msra.mxu0 0.0
        %372 = vmatprep.subr.mxu0 0.0
        %373 = vmatpush1.msra.mxu0 0.0
        %374 = vmatprep.subr.mxu0 0.0
        %375 = vmatpush1.msra.mxu0 0.0
        %376 = vmatprep.subr.mxu0 0.0
        %377 = vmatpush1.msra.mxu0 0.0
        %378 = vmatprep.subr.mxu0 0.0
        %379 = vmatpush1.msra.mxu0 0.0
        %380 = vmatprep.subr.mxu0 0.0
        %381 = vmatpush1.msra.mxu0 0.0
        %382 = vmatprep.subr.mxu0 0.0
        %383 = vmatpush1.msra.mxu0 0.0
        %384 = vmatprep.subr.mxu0 0.0
        %385 = vmatpush1.msra.mxu0 0.0
        %386 = vmatprep.subr.mxu0 0.0
        %387 = vmatpush1.msra.mxu0 0.0
        %388 = vmatprep.subr.mxu0 0.0
        %389 = vmatpush1.msra.mxu0 0.0
        %390 = vmatprep.subr.mxu0 0.0
        %391 = vmatpush1.msra.mxu0 0.0
        %392 = vmatprep.subr.mxu0 0.0
        %393 = vmatpush1.msra.mxu0 0.0
        %394 = vmatprep.subr.mxu0 0.0
        %395 = vmatpush1.msra.mxu0 0.0
        %396 = vmatprep.subr.mxu0 0.0
        %397 = vmatpush1.msra.mxu0 0.0
        %398 = vmatprep.subr.mxu0 0.0
        %399 = vmatpush1.msra.mxu0 0.0
        %400 = vmatprep.subr.mxu0 0.0
        %401 = vmatpush1.msra.mxu0 %v368
        %402 = vmatprep.subr.mxu0 0.0
        %403 = vmatpush2.msra.mxu0 0.0
        %404 = vmatprep.subr.mxu0 0.0
        %405 = vmatpush2.msra.mxu0 0.0
        %406 = vmatprep.subr.mxu0 0.0
        %407 = vmatpush2.msra.mxu0 0.0
        %408 = vmatprep.subr.mxu0 0.0
        %409 = vmatpush2.msra.mxu0 0.0
        %410 = vmatprep.subr.mxu0 0.0
        %411 = vmatpush2.msra.mxu0 0.0
        %412 = vmatprep.subr.mxu0 0.0
        %413 = vmatpush2.msra.mxu0 0.0
        %414 = vmatprep.subr.mxu0 0.0
        %415 = vmatpush2.msra.mxu0 0.0
        %416 = vmatprep.subr.mxu0 0.0
        %417 = vmatpush2.msra.mxu0 0.0
        %418 = vmatprep.subr.mxu0 0.0
        %419 = vmatpush2.msra.mxu0 0.0
        %420 = vmatprep.subr.mxu0 0.0
        %421 = vmatpush2.msra.mxu0 0.0
        %422 = vmatprep.subr.mxu0 0.0
        %423 = vmatpush2.msra.mxu0 0.0
        %424 = vmatprep.subr.mxu0 0.0
        %425 = vmatpush2.msra.mxu0 0.0
        %426 = vmatprep.subr.mxu0 0.0
        %427 = vmatpush2.msra.mxu0 0.0
        %428 = vmatprep.subr.mxu0 0.0
        %429 = vmatpush2.msra.mxu0 0.0
        %430 = vmatprep.subr.mxu0 0.0
        %431 = vmatpush2.msra.mxu0 0.0
        %432 = vmatprep.subr.mxu0 0.0
        %433 = vmatpush2.msra.mxu0 0.0
        %434 = vmatprep.mubr.f32.mxu0 0.0
        %435 = vmatmul.mubr.f32.gmra.mxu0 %v364
        %v436 = vpop.f32.mrf.mxu0
        %v437 = vadd.f32 0.0, %v436
        %v438 = vpop.f32.mrf.mxu0
        %439 = vdwg.mxu0
        %v441 = vrot.slane %v437, 1
        %v443 = vadd.f32 %v437, %v441
        %v444 = vxor.u32 %v443, 2147483648
        %v445 = vmul.f32 %v444, 1.442695
        %v446 = vpow.pop %v445
        %v447 = vadd.f32 %v446, 1.0
        %v448 = vrcp.pop %v447
        %v449 = vmul.f32 1.0, %v448
        %vm450 = vcmask 253952
        %451 = vst.msk [vmem:[%s187] sm:$0x1] %vm450, %v449
        %s452 = sand.u32 %s96, 1
        %s453 = scalar_lea.sflag [#allocation4], %s452
        %s454 = sand.u32 %s96, 1
        %s455 = scalar_lea.vmem [#allocation5], %s454
        // Predicated region
        $region37: #{tpu_custom_call.1} parent=31 // pred_check
          %p456 = pneg %p106
        $region38: #{tpu_custom_call.1} parent=31 // pred_check_branch
          %458 = sbr.rel (%p456) target = $region40
        $region39: #{tpu_custom_call.1} parent=31 // pred_region
          %s460 = ssub.s32 16, 16
          %461 = vsyncadd %s453, %s460
          %s462 = smul.addr %s20, 16
          %s463 = scalar_lea.hbm %s3, %s462
          %s465 = sshll.u32 %s455, 4
          %s466 = int_to_ptr.vmem [resolvable:$true] %s465
          %468 = dma.vmem_to_hbm [thread:$0]  %s466, 16, %s463, %s453
        $region40: #{tpu_custom_call.1} parent=31 // pred_fallthru
          _
      $region32: #{tpu_custom_call.1} parent=5 // pred_fallthru
        _
      %p469 = scmp.le.s32.totalorder 2, %s15
      // Predicated region
      $region41: #{tpu_custom_call.1} parent=5 // pred_check
        %p470 = pneg %p469
      $region42: #{tpu_custom_call.1} parent=5 // pred_check_branch
        %472 = sbr.rel (%p470) target = $region44
      $region43: #{tpu_custom_call.1} parent=5 // pred_region
        %s473 = ssub.s32 %s15, 2
        // Predicated region
        $region45: #{tpu_custom_call.1} parent=43 // pred_check
          %p474 = pneg %p112
        $region46: #{tpu_custom_call.1} parent=43 // pred_check_branch
          %476 = sbr.rel (%p474) target = $region48
        $region47: #{tpu_custom_call.1} parent=43 // pred_region
          %s477 = sand.u32 %s97, 1
          %s478 = scalar_lea.sflag [#allocation4], %s477
          %s479 = sand.u32 %s97, 1
          %s480 = scalar_lea.vmem [#allocation5], %s479
          %481 = dma.done %s478, 16
        $region48: #{tpu_custom_call.1} parent=43 // pred_fallthru
          _
      $region44: #{tpu_custom_call.1} parent=5 // pred_fallthru
        _
    $region6: #{tpu_custom_call.1} parent=1 // loop_footer
      %s19 = sadd.s32 1, %s15
    $region7: #{tpu_custom_call.1} parent=1 // loop_footer_branch
      %14 = sbr.rel target = $region3
    $region8: #{tpu_custom_call.1} parent=1 // loop_exit
      _
    %482 = vsyncpa [#allocation3], 1
    %s483 = scalar_lea.sflag [#allocation3], 1
    %484 = vsyncpa %s483, 1
    %485 = vsyncpa [#allocation4], 1
    %s486 = scalar_lea.sflag [#allocation4], 1
    %487 = vsyncpa %s486, 1

</llo_original>
